<compile_context>
chip_gen: v7x
topology: tpu7x:2x2x1
jax: 0.10.0
libtpu: 0.0.40
codegen_flags: <defaults>
</compile_context>

<pallas_src>
import jax
import jax.numpy as jnp
from jax.experimental import pallas as pl
from jax.experimental.pallas import tpu as pltpu

EPS = 1e-5


def mlp_layer_kernel(x_ref, w_ref, gamma_ref, beta_ref, o_ref):
    # ---- Linear (bias omitted: cancelled exactly by BN mean subtraction) ----
    y = jnp.dot(x_ref[...], w_ref[...], preferred_element_type=jnp.float32)  # (N, T)

    # ---- BatchNorm1d (training mode), one-pass stats over the batch dim ----
    n = y.shape[0]
    inv_n = 1.0 / n
    mean = jnp.sum(y, axis=0, keepdims=True) * inv_n                    # (1, T)
    mean_sq = jnp.sum(y * y, axis=0, keepdims=True) * inv_n             # (1, T)
    var = jnp.maximum(mean_sq - mean * mean, 0.0)                       # biased var
    scale = gamma_ref[...] * jax.lax.rsqrt(var + EPS)                   # gamma folded in
    z = (y - mean) * scale + beta_ref[...]                              # (N, T)

    # ---- SiLU: z * sigmoid(z) == 0.5 * z * (1 + tanh(z/2))  (EUP) ----
    o_ref[...] = 0.5 * z * (1.0 + jnp.tanh(0.5 * z))


def mlp_layer(x, w_t, gamma, beta, *, tile_out=128):
    """x: (N, IN) f32, w_t: (IN, OUT), gamma/beta: (1, OUT). Returns (N, OUT) f32."""
    N, IN = x.shape
    OUT = w_t.shape[1]

    # Pad OUT up to a lane-dense multiple of 128 so vregs / stores are unmasked.
    out_pad = pl.cdiv(OUT, tile_out) * tile_out
    pad = out_pad - OUT
    if pad:
        w_t = jnp.pad(w_t, ((0, 0), (0, pad)))
        gamma = jnp.pad(gamma, ((0, 0), (0, pad)))   # padded gamma = 0 -> padded out = 0
        beta = jnp.pad(beta, ((0, 0), (0, pad)))

    out = pl.pallas_call(
        mlp_layer_kernel,
        out_shape=jax.ShapeDtypeStruct((N, out_pad), jnp.float32),
        grid_spec=pltpu.PrefetchScalarGridSpec(
            num_scalar_prefetch=0,
            grid=(out_pad // tile_out,),          # BN stats are per-feature -> OUT tiles independent
            in_specs=[
                pl.BlockSpec((N, IN), lambda j: (0, 0)),
                pl.BlockSpec((IN, tile_out), lambda j: (0, j)),
                pl.BlockSpec((1, tile_out), lambda j: (0, j)),
                pl.BlockSpec((1, tile_out), lambda j: (0, j)),
            ],
            out_specs=pl.BlockSpec((N, tile_out), lambda j: (0, j)),
        ),
        compiler_params=pltpu.CompilerParams(
            dimension_semantics=("parallel",),    # shardable across TCs on v7x
        ),
    )(x, w_t, gamma, beta)
    return out[:, :OUT]


if __name__ == "__main__":
    key = jax.random.PRNGKey(0)
    N, IN, OUT = 8, 32, 64

    kx, kw, kb = jax.random.split(key, 3)
    x = jax.random.normal(kx, (N, IN), dtype=jnp.float32)

    # Deterministic parameter init (mimics nn.Linear's uniform(-1/sqrt(IN), 1/sqrt(IN)))
    bound = 1.0 / (IN ** 0.5)
    w = jax.random.uniform(kw, (OUT, IN), minval=-bound, maxval=bound, dtype=jnp.float32)
    b = jax.random.uniform(kb, (OUT,), minval=-bound, maxval=bound, dtype=jnp.float32)
    gamma = jnp.ones((OUT,), dtype=jnp.float32)   # BatchNorm1d weight init
    beta = jnp.zeros((OUT,), dtype=jnp.float32)   # BatchNorm1d bias init

    out = mlp_layer(
        x,
        w.T,                          # pre-transpose to (IN, OUT)
        gamma.reshape(1, OUT),
        beta.reshape(1, OUT),
    )
    jax.block_until_ready(out)

    # Reference: full module semantics (Linear WITH bias -> training-mode BN -> SiLU).
    # The bias is included here to demonstrate it is cancelled by BN's mean subtraction.
    y_ref = x @ w.T + b
    mean = y_ref.mean(axis=0, keepdims=True)
    var = ((y_ref - mean) ** 2).mean(axis=0, keepdims=True)
    z_ref = gamma * (y_ref - mean) / jnp.sqrt(var + EPS) + beta
    ref = z_ref * jax.nn.sigmoid(z_ref)

    assert out.shape == (N, OUT)
    assert jnp.allclose(out, ref, atol=1e-3, rtol=1e-3), float(jnp.max(jnp.abs(out - ref)))

    print("KERNEL_OK")
</pallas_src>

<mosaic_0001>
module attributes {stable_mosaic.version = 11 : i64} {
  func.func @mlp_layer_kernel(%arg0: i32, %arg1: memref<8x32xf32, #tpu.memory_space<vmem>>, %arg2: memref<32x128xf32, #tpu.memory_space<vmem>>, %arg3: memref<1x128xf32, #tpu.memory_space<vmem>>, %arg4: memref<1x128xf32, #tpu.memory_space<vmem>>, %arg5: memref<8x128xf32, #tpu.memory_space<vmem>>) attributes {dimension_semantics = [#tpu.dimension_semantics<parallel>], iteration_bounds = array<i64: 1>, scalar_prefetch = 0 : i64, scratch_operands = 0 : i64, tpu.core_type = #tpu.core_type<tc>, window_params = [{pipeline_mode = #tpu.pipeline_mode<synchronous>, transform_indices = @transform_0, window_bounds = array<i64: 8, 32>}, {transform_indices = @transform_1, window_bounds = array<i64: 32, 128>}, {transform_indices = @transform_2, window_bounds = array<i64: 1, 128>}, {transform_indices = @transform_3, window_bounds = array<i64: 1, 128>}, {transform_indices = @transform_4, window_bounds = array<i64: 8, 128>}]} {
    %c0 = arith.constant 0 : index
    %c0_0 = arith.constant 0 : index
    %0 = vector.load %arg1[%c0, %c0_0] : memref<8x32xf32, #tpu.memory_space<vmem>>, vector<8x32xf32>
    %c0_1 = arith.constant 0 : index
    %c0_2 = arith.constant 0 : index
    %1 = vector.load %arg2[%c0_1, %c0_2] : memref<32x128xf32, #tpu.memory_space<vmem>>, vector<32x128xf32>
    %cst = arith.constant dense<0.000000e+00> : vector<8x128xf32>
    %2 = tpu.matmul %0, %1, %cst {dimension_numbers = #tpu.dot_dimension_numbers<[1], [0], [0], [1], [0, 0, 1, 1], [], []>} : vector<8x32xf32>, vector<32x128xf32>, vector<8x128xf32> -> vector<8x128xf32>
    %cst_3 = arith.constant dense<0.000000e+00> : vector<128xf32>
    %3 = vector.multi_reduction <add>, %2, %cst_3 [0] : vector<8x128xf32> to vector<128xf32>
    %4 = vector.shape_cast %3 : vector<128xf32> to vector<1x128xf32>
    %cst_4 = arith.constant 1.250000e-01 : f32
    %5 = vector.broadcast %cst_4 : f32 to vector<1x128xf32>
    %6 = arith.mulf %4, %5 : vector<1x128xf32>
    %7 = arith.mulf %2, %2 : vector<8x128xf32>
    %cst_5 = arith.constant dense<0.000000e+00> : vector<128xf32>
    %8 = vector.multi_reduction <add>, %7, %cst_5 [0] : vector<8x128xf32> to vector<128xf32>
    %9 = vector.shape_cast %8 : vector<128xf32> to vector<1x128xf32>
    %cst_6 = arith.constant 1.250000e-01 : f32
    %10 = vector.broadcast %cst_6 : f32 to vector<1x128xf32>
    %11 = arith.mulf %9, %10 : vector<1x128xf32>
    %12 = arith.mulf %6, %6 : vector<1x128xf32>
    %13 = arith.subf %11, %12 : vector<1x128xf32>
    %cst_7 = arith.constant 0.000000e+00 : f32
    %14 = vector.broadcast %cst_7 : f32 to vector<1x128xf32>
    %15 = arith.maximumf %13, %14 : vector<1x128xf32>
    %c0_8 = arith.constant 0 : index
    %c0_9 = arith.constant 0 : index
    %16 = vector.load %arg3[%c0_8, %c0_9] : memref<1x128xf32, #tpu.memory_space<vmem>>, vector<1x128xf32>
    %cst_10 = arith.constant 9.99999974E-6 : f32
    %17 = vector.broadcast %cst_10 : f32 to vector<1x128xf32>
    %18 = arith.addf %15, %17 : vector<1x128xf32>
    %19 = math.rsqrt %18 : vector<1x128xf32>
    %20 = arith.mulf %16, %19 : vector<1x128xf32>
    %21 = vector.broadcast %6 : vector<1x128xf32> to vector<8x128xf32>
    %22 = arith.subf %2, %21 : vector<8x128xf32>
    %23 = vector.broadcast %20 : vector<1x128xf32> to vector<8x128xf32>
    %24 = arith.mulf %22, %23 : vector<8x128xf32>
    %c0_11 = arith.constant 0 : index
    %c0_12 = arith.constant 0 : index
    %25 = vector.load %arg4[%c0_11, %c0_12] : memref<1x128xf32, #tpu.memory_space<vmem>>, vector<1x128xf32>
    %26 = vector.broadcast %25 : vector<1x128xf32> to vector<8x128xf32>
    %27 = arith.addf %24, %26 : vector<8x128xf32>
    %cst_13 = arith.constant 5.000000e-01 : f32
    %28 = vector.broadcast %cst_13 : f32 to vector<8x128xf32>
    %29 = arith.mulf %28, %27 : vector<8x128xf32>
    %cst_14 = arith.constant 5.000000e-01 : f32
    %30 = vector.broadcast %cst_14 : f32 to vector<8x128xf32>
    %31 = arith.mulf %30, %27 : vector<8x128xf32>
    %32 = math.tanh %31 : vector<8x128xf32>
    %cst_15 = arith.constant 1.000000e+00 : f32
    %33 = vector.broadcast %cst_15 : f32 to vector<8x128xf32>
    %34 = arith.addf %33, %32 : vector<8x128xf32>
    %35 = arith.mulf %29, %34 : vector<8x128xf32>
    %c0_16 = arith.constant 0 : index
    %c0_17 = arith.constant 0 : index
    %36 = vector.load %arg5[%c0_16, %c0_17] : memref<8x128xf32, #tpu.memory_space<vmem>>, vector<8x128xf32>
    tpu.vector_store %arg5[%c0_16, %c0_17], %35 {strides = array<i32>} : memref<8x128xf32, #tpu.memory_space<vmem>>, vector<8x128xf32>,
    return
  }
  func.func @transform_0(%arg0: i32) -> (i32, i32) {
    %c0_i32 = arith.constant 0 : i32
    %c0_i32_0 = arith.constant 0 : i32
    %c0_i32_1 = arith.constant 0 : i32
    return %c0_i32, %c0_i32_0 : i32, i32
  }
  func.func @transform_1(%arg0: i32) -> (i32, i32) {
    %c0_i32 = arith.constant 0 : i32
    %c0_i32_0 = arith.constant 0 : i32
    return %c0_i32, %arg0 : i32, i32
  }
  func.func @transform_2(%arg0: i32) -> (i32, i32) {
    %c0_i32 = arith.constant 0 : i32
    %c0_i32_0 = arith.constant 0 : i32
    return %c0_i32, %arg0 : i32, i32
  }
  func.func @transform_3(%arg0: i32) -> (i32, i32) {
    %c0_i32 = arith.constant 0 : i32
    %c0_i32_0 = arith.constant 0 : i32
    return %c0_i32, %arg0 : i32, i32
  }
  func.func @transform_4(%arg0: i32) -> (i32, i32) {
    %c0_i32 = arith.constant 0 : i32
    %c0_i32_0 = arith.constant 0 : i32
    return %c0_i32, %arg0 : i32, i32
  }
}

</mosaic_0001>

<llo_original>
// kernel: tpu_custom_call.1
$region0: #{tpu_custom_call.1}
  #allocation0 [shape = 'u32[]', space=smem, size = 0x4, offset = 0x4, fixed_abs, tag = 'smem constant byte address 0x4 - core index']
  #allocation1 [shape = 'u32[144,128]{1,0:T(1,128)}', space=vmem, size = 0x12000, scoped, tag = 'internal scratch']
  %s0 = inlined_call_operand.hbm [shape: f32[8,32], index: 0, kind: input, shape index: {}]
  %s1 = inlined_call_operand.hbm [shape: f32[32,128], index: 1, kind: input, shape index: {}]
  %s2 = inlined_call_operand.vmem [shape: f32[1,128], index: 2, kind: input, shape index: {}]
  %s3 = inlined_call_operand.vmem [shape: f32[1,128], index: 3, kind: input, shape index: {}]
  %s4 = inlined_call_operand.hbm [shape: f32[8,128], index: 4, kind: output, shape index: {}]
  %s5 = sld [smem:[#allocation0]]
  $region34: #{tpu_custom_call.1} parent=0
    _
  %s7 = ssub.s32 1, %s5
  %s8 = scalar_select 0, %s7, %s5
  $region1: #{tpu_custom_call.1} parent=0
    #allocation2 [shape = 'u8[4096]{0}', space=vmem, size = 0x1000, scoped, tag = 'input window, operand 0, single buffered']
    #allocation3 [shape = 's32[1]{0}', space=sflag, size = 0x4, scoped, tag = 'scoped memory for tpu_custom_call.1']
    #allocation4 [shape = 's32[1]{0}', space=sflag, size = 0x4, scoped, tag = 'scoped memory for tpu_custom_call.1']
    #allocation5 [shape = 'u8[16384]{0}', space=vmem, size = 0x4000, scoped, tag = 'input window, operand 1, single buffered']
    #allocation6 [shape = 's32[1]{0}', space=sflag, size = 0x4, scoped, tag = 'scoped memory for tpu_custom_call.1']
    #allocation7 [shape = 'u8[4096]{0}', space=vmem, size = 0x1000, scoped, tag = 'output window, operand 0, single buffered']
    %9 = vsyncpa [#allocation3], 0
    %10 = vsyncpa [#allocation6], 0
    %11 = vsyncpa [#allocation4], 0
    // Predicated region
    $region2: #{tpu_custom_call.1} parent=1 // pred_check
      _
    $region3: #{tpu_custom_call.1} parent=1 // pred_check_branch
      %13 = sbr.rel (0) target = $region5
    $region4: #{tpu_custom_call.1} parent=1 // pred_region
      %s15 = ssub.s32 128, 128
      %16 = vsyncadd [#allocation3], %s15
      %s18 = sshll.u32 [#allocation2], 4
      %s19 = int_to_ptr.vmem [resolvable:$true] %s18
      %21 = dma.hbm_to_vmem [thread:$0]  %s0, 128, %s19, [#allocation3]
    $region5: #{tpu_custom_call.1} parent=1 // pred_fallthru
      _
    // Predicated region
    $region6: #{tpu_custom_call.1} parent=1 // pred_check
      _
    $region7: #{tpu_custom_call.1} parent=1 // pred_check_branch
      %23 = sbr.rel (0) target = $region9
    $region8: #{tpu_custom_call.1} parent=1 // pred_region
      %s25 = ssub.s32 512, 512
      %26 = vsyncadd [#allocation6], %s25
      %s27 = sshll.u32 [#allocation5], 4
      %s28 = int_to_ptr.vmem [resolvable:$true] %s27
      %33 = dma.hbm_to_vmem [thread:$0]  %s1, 512, %s28, [#allocation6], 128, 128, 8
    $region9: #{tpu_custom_call.1} parent=1 // pred_fallthru
      _
    // Predicated region
    $region10: #{tpu_custom_call.1} parent=1 // pred_check
      _
    $region11: #{tpu_custom_call.1} parent=1 // pred_check_branch
      %35 = sbr.rel (0) target = $region13
    $region12: #{tpu_custom_call.1} parent=1 // pred_region
      _
    $region13: #{tpu_custom_call.1} parent=1 // pred_fallthru
      _
    // Predicated region
    $region14: #{tpu_custom_call.1} parent=1 // pred_check
      _
    $region15: #{tpu_custom_call.1} parent=1 // pred_check_branch
      %37 = sbr.rel (0) target = $region17
    $region16: #{tpu_custom_call.1} parent=1 // pred_region
      _
    $region17: #{tpu_custom_call.1} parent=1 // pred_fallthru
      _
    // Predicated region
    $region18: #{tpu_custom_call.1} parent=1 // pred_check
      _
    $region19: #{tpu_custom_call.1} parent=1 // pred_check_branch
      %39 = sbr.rel (0) target = $region21
    $region20: #{tpu_custom_call.1} parent=1 // pred_region
      %40 = dma.done [#allocation3], 128
    $region21: #{tpu_custom_call.1} parent=1 // pred_fallthru
      _
    // Predicated region
    $region22: #{tpu_custom_call.1} parent=1 // pred_check
      _
    $region23: #{tpu_custom_call.1} parent=1 // pred_check_branch
      %42 = sbr.rel (0) target = $region25
    $region24: #{tpu_custom_call.1} parent=1 // pred_region
      %43 = dma.done [#allocation6], 512
    $region25: #{tpu_custom_call.1} parent=1 // pred_fallthru
      _
    %v44 = vld [vmem:[#allocation2] sm:$0xff]
    %v45 = vld [vmem:[#allocation5] sm:$0xff]
    %v46 = vld [vmem:[#allocation5 + $0x8] sm:$0xff]
    %v47 = vld [vmem:[#allocation5 + $0x10] sm:$0xff]
    %v48 = vld [vmem:[#allocation5 + $0x18] sm:$0xff]
    %vm49 = vcmask 261120
    %v51 = vsel %vm49, %v44, 0
    %53 = vmatprep.subr.mxu0 0.0
    %54 = vmatpush1.msra.mxu0 %v45
    %55 = vmatprep.subr.mxu0 0.0
    %56 = vmatpush1.msra.mxu0 %v46
    %57 = vmatprep.subr.mxu0 0.0
    %58 = vmatpush1.msra.mxu0 %v47
    %59 = vmatprep.subr.mxu0 0.0
    %60 = vmatpush1.msra.mxu0 %v48
    %61 = vmatprep.subr.mxu0 0.0
    %62 = vmatpush1.msra.mxu0 0.0
    %63 = vmatprep.subr.mxu0 0.0
    %64 = vmatpush1.msra.mxu0 0.0
    %65 = vmatprep.subr.mxu0 0.0
    %66 = vmatpush1.msra.mxu0 0.0
    %67 = vmatprep.subr.mxu0 0.0
    %68 = vmatpush1.msra.mxu0 0.0
    %69 = vmatprep.subr.mxu0 0.0
    %70 = vmatpush1.msra.mxu0 0.0
    %71 = vmatprep.subr.mxu0 0.0
    %72 = vmatpush1.msra.mxu0 0.0
    %73 = vmatprep.subr.mxu0 0.0
    %74 = vmatpush1.msra.mxu0 0.0
    %75 = vmatprep.subr.mxu0 0.0
    %76 = vmatpush1.msra.mxu0 0.0
    %77 = vmatprep.subr.mxu0 0.0
    %78 = vmatpush1.msra.mxu0 0.0
    %79 = vmatprep.subr.mxu0 0.0
    %80 = vmatpush1.msra.mxu0 0.0
    %81 = vmatprep.subr.mxu0 0.0
    %82 = vmatpush1.msra.mxu0 0.0
    %83 = vmatprep.subr.mxu0 0.0
    %84 = vmatpush1.msra.mxu0 0.0
    %85 = vmatprep.subr.mxu0 0.0
    %86 = vmatpush1.msra.mxu0 0.0
    %87 = vmatprep.subr.mxu0 0.0
    %88 = vmatpush1.msra.mxu0 0.0
    %89 = vmatprep.subr.mxu0 0.0
    %90 = vmatpush1.msra.mxu0 0.0
    %91 = vmatprep.subr.mxu0 0.0
    %92 = vmatpush1.msra.mxu0 0.0
    %93 = vmatprep.subr.mxu0 0.0
    %94 = vmatpush1.msra.mxu0 0.0
    %95 = vmatprep.subr.mxu0 0.0
    %96 = vmatpush1.msra.mxu0 0.0
    %97 = vmatprep.subr.mxu0 0.0
    %98 = vmatpush1.msra.mxu0 0.0
    %99 = vmatprep.subr.mxu0 0.0
    %100 = vmatpush1.msra.mxu0 0.0
    %101 = vmatprep.subr.mxu0 0.0
    %102 = vmatpush1.msra.mxu0 0.0
    %103 = vmatprep.subr.mxu0 0.0
    %104 = vmatpush1.msra.mxu0 0.0
    %105 = vmatprep.subr.mxu0 0.0
    %106 = vmatpush1.msra.mxu0 0.0
    %107 = vmatprep.subr.mxu0 0.0
    %108 = vmatpush1.msra.mxu0 0.0
    %109 = vmatprep.subr.mxu0 0.0
    %110 = vmatpush1.msra.mxu0 0.0
    %111 = vmatprep.subr.mxu0 0.0
    %112 = vmatpush1.msra.mxu0 0.0
    %113 = vmatprep.subr.mxu0 0.0
    %114 = vmatpush1.msra.mxu0 0.0
    %115 = vmatprep.subr.mxu0 0.0
    %116 = vmatpush1.msra.mxu0 0.0
    %117 = vmatprep.mubr.f32.mxu0 0.0
    %118 = vmatmul.mubr.f32.gmra.mrb[0].mxu0 %v51
    %v119 = vpop.f32.mrb[0].mxu0
    %v120 = vadd.f32 0.0, %v119
    %v121 = vpop.f32.mrb[0].mxu0
    %122 = vdwg.mxu0
    %v123 = vrot.slane %v120, 4
    %v124 = vadd.f32 %v120, %v123
    %v125 = vrot.slane %v124, 2
    %v126 = vadd.f32 %v124, %v125
    %v127 = vrot.slane %v126, 1
    %v128 = vadd.f32 %v126, %v127
    %v129 = vmul.f32 %v128, 0.125
    %v130 = vmul.f32 %v120, %v120
    %v131 = vrot.slane %v130, 4
    %v132 = vadd.f32 %v130, %v131
    %v133 = vrot.slane %v132, 2
    %v134 = vadd.f32 %v132, %v133
    %v135 = vrot.slane %v134, 1
    %v136 = vadd.f32 %v134, %v135
    %v137 = vmul.f32 %v136, 0.125
    %v138 = vmul.f32 %v129, %v129
    %v139 = vsub.f32 %v137, %v138
    %v140 = vmax.f32 %v139, 0.0
    %v141 = vld [vmem:[%s2] sm:$0x1]
    %v142 = vadd.f32 %v140, 1e-05
    %v143 = vrsqrt.pop %v142
    %v144 = vmul.f32 %v141, %v143
    %v145 = vsub.f32 %v120, %v129
    %v147 = vlaneseq
    %v148 = vshrl.u32 %v147, 7
    %v149 = vsub.s32 0, %v148
    %v150 = vrot.slane %v144, %v149
    %v152 = vmul.f32 %v145, %v150
    %v153 = vld [vmem:[%s3] sm:$0x1]
    %v155 = vlaneseq
    %v156 = vshrl.u32 %v155, 7
    %v157 = vsub.s32 0, %v156
    %v158 = vrot.slane %v153, %v157
    %v160 = vadd.f32 %v152, %v158
    %v161 = vmul.f32 %v160, 0.5
    %v162 = vtanh.pop %v161
    %v163 = vadd.f32 %v162, 1.0
    %v164 = vmul.f32 %v161, %v163
    %165 = vst [vmem:[#allocation7] sm:$0xff] %v164
    // Predicated region
    $region26: #{tpu_custom_call.1} parent=1 // pred_check
      _
    $region27: #{tpu_custom_call.1} parent=1 // pred_check_branch
      %167 = sbr.rel (0) target = $region29
    $region28: #{tpu_custom_call.1} parent=1 // pred_region
      %s169 = ssub.s32 128, 128
      %170 = vsyncadd [#allocation4], %s169
      %s172 = sshll.u32 [#allocation7], 4
      %s173 = int_to_ptr.vmem [resolvable:$true] %s172
      %175 = dma.vmem_to_hbm [thread:$0]  %s173, 128, %s4, [#allocation4]
    $region29: #{tpu_custom_call.1} parent=1 // pred_fallthru
      _
    // Predicated region
    $region30: #{tpu_custom_call.1} parent=1 // pred_check
      _
    $region31: #{tpu_custom_call.1} parent=1 // pred_check_branch
      %177 = sbr.rel (0) target = $region33
    $region32: #{tpu_custom_call.1} parent=1 // pred_region
      %178 = dma.done [#allocation4], 128
    $region33: #{tpu_custom_call.1} parent=1 // pred_fallthru
      _
    %179 = vsyncpa [#allocation3], 1
    %180 = vsyncpa [#allocation6], 1
    %181 = vsyncpa [#allocation4], 1

</llo_original>
